<compile_context>
chip_gen: v7x
topology: tpu7x:2x2x1
jax: 0.10.0
libtpu: 0.0.40
codegen_flags: <defaults>
</compile_context>

<pallas_src>
import jax
import jax.numpy as jnp
from jax.experimental import pallas as pl
from jax.experimental.pallas import tpu as pltpu

H = 32      # synthetic pooled hidden size
D = 128     # synthetic CLIP embed (projection) dim
EPS = 1e-8  # F.cosine_similarity eps (norms clamped from below)


def metrics_kernel(img_ref, txt_ref, wi_ref, wt_ref, out_ref):
    # --- projection heads: two tiny independent MXU passes (2,H)@(H,D) -------
    ei = jnp.dot(img_ref[...], wi_ref[...], preferred_element_type=jnp.float32)  # (2, D)
    et = jnp.dot(txt_ref[...], wt_ref[...], preferred_element_type=jnp.float32)  # (2, D)

    # --- features / features.norm(dim=1, keepdim=True) via rsqrt (EUP) -------
    vi = ei * jax.lax.rsqrt(jnp.sum(ei * ei, axis=-1, keepdims=True))   # unit rows (img)
    vt = et * jax.lax.rsqrt(jnp.sum(et * et, axis=-1, keepdims=True))   # unit rows (txt)

    v0 = vi[0:1, :]   # image_one features
    v1 = vi[1:2, :]   # image_two features
    v2 = vt[0:1, :]   # caption_one features
    v3 = vt[1:2, :]   # caption_two features

    # --- edit directions ------------------------------------------------------
    a = v1 - v0       # img_feat_two - img_feat_one
    b = v3 - v2       # text_feat_two - text_feat_one

    # --- five dot products, each a single (1, D) lane reduction ---------------
    num    = jnp.sum(a * b)     # (img diff) . (txt diff)
    na2    = jnp.sum(a * a)     # |img diff|^2
    nb2    = jnp.sum(b * b)     # |txt diff|^2
    clip_i = jnp.sum(v0 * v3)   # F.cosine_similarity(img_feat_one, text_feat_two)
    clip_t = jnp.sum(v1 * v3)   # F.cosine_similarity(img_feat_two, text_feat_two)

    # --- directional similarity: |cos(a, b)| with eps-clamped norms -----------
    n_a = jnp.maximum(jnp.sqrt(jnp.maximum(na2, 0.0)), EPS)
    n_b = jnp.maximum(jnp.sqrt(jnp.maximum(nb2, 0.0)), EPS)
    dir_sim = jnp.abs(num) / (n_a * n_b)

    # Grouped scalar stores (short epilogue).
    out_ref[0] = dir_sim
    out_ref[1] = clip_i
    out_ref[2] = clip_t


def my_metrics(img_pooled, txt_pooled, w_img, w_txt):
    # Four separate operands — no host-side concatenation / extra XLA dispatch.
    return pl.pallas_call(
        metrics_kernel,
        out_shape=jax.ShapeDtypeStruct((3,), jnp.float32),
        in_specs=[
            pl.BlockSpec(memory_space=pltpu.MemorySpace.VMEM),
            pl.BlockSpec(memory_space=pltpu.MemorySpace.VMEM),
            pl.BlockSpec(memory_space=pltpu.MemorySpace.VMEM),
            pl.BlockSpec(memory_space=pltpu.MemorySpace.VMEM),
        ],
        out_specs=pl.BlockSpec(memory_space=pltpu.MemorySpace.SMEM),
    )(img_pooled, txt_pooled, w_img, w_txt)


def ref_metrics(img_pooled, txt_pooled, w_img, w_txt):
    ie = img_pooled @ w_img
    te = txt_pooled @ w_txt
    inorm = ie / jnp.linalg.norm(ie, axis=1, keepdims=True)
    tnorm = te / jnp.linalg.norm(te, axis=1, keepdims=True)

    def cos(a, b):
        return jnp.sum(a * b) / (
            jnp.maximum(jnp.linalg.norm(a), EPS) * jnp.maximum(jnp.linalg.norm(b), EPS)
        )

    return jnp.array(
        [
            jnp.abs(cos(inorm[1] - inorm[0], tnorm[1] - tnorm[0])),
            cos(inorm[0], tnorm[1]),
            cos(inorm[1], tnorm[1]),
        ],
        dtype=jnp.float32,
    )


if __name__ == "__main__":
    key = jax.random.PRNGKey(0)
    k1, k2, k3, k4 = jax.random.split(key, 4)

    # Deterministic synthetic inputs: pooled encoder states for two images and
    # two captions (stand-ins for the frozen CLIP towers' pooled outputs).
    img_pooled = jax.random.normal(k1, (2, H), dtype=jnp.float32)
    txt_pooled = jax.random.normal(k2, (2, H), dtype=jnp.float32)

    # Deterministic synthetic projection-head parameters.
    w_img = jax.random.normal(k3, (H, D), dtype=jnp.float32) / jnp.sqrt(jnp.float32(H))
    w_txt = jax.random.normal(k4, (H, D), dtype=jnp.float32) / jnp.sqrt(jnp.float32(H))

    out = jax.block_until_ready(my_metrics(img_pooled, txt_pooled, w_img, w_txt))
    ref = ref_metrics(img_pooled, txt_pooled, w_img, w_txt)
    assert jnp.allclose(out, ref, atol=1e-5, rtol=1e-5), (out, ref)

    result = {
        "directional_similarity": float(out[0]),
        "Clip-I": float(out[1]),
        "Clip-T": float(out[2]),
    }
    # TODO(synk): the pretrained CLIP vision/text transformers, tokenizer and
    # image_processor have no Pallas equivalent here; they are replaced by
    # deterministic synthetic pooled features + projection matmuls.
    print("KERNEL_OK")
</pallas_src>

<mosaic_0001>
module attributes {stable_mosaic.version = 11 : i64} {
  func.func @metrics_kernel(%arg0: memref<2x32xf32, #tpu.memory_space<vmem>>, %arg1: memref<2x32xf32, #tpu.memory_space<vmem>>, %arg2: memref<32x128xf32, #tpu.memory_space<vmem>>, %arg3: memref<32x128xf32, #tpu.memory_space<vmem>>, %arg4: memref<3xf32, #tpu.memory_space<smem>>) attributes {dimension_semantics = [], scalar_prefetch = 0 : i64, scratch_operands = 0 : i64, tpu.core_type = #tpu.core_type<tc>} {
    %c0 = arith.constant 0 : index
    %c0_0 = arith.constant 0 : index
    %0 = vector.load %arg0[%c0, %c0_0] : memref<2x32xf32, #tpu.memory_space<vmem>>, vector<2x32xf32>
    %c0_1 = arith.constant 0 : index
    %c0_2 = arith.constant 0 : index
    %1 = vector.load %arg2[%c0_1, %c0_2] : memref<32x128xf32, #tpu.memory_space<vmem>>, vector<32x128xf32>
    %cst = arith.constant dense<0.000000e+00> : vector<2x128xf32>
    %2 = tpu.matmul %0, %1, %cst {dimension_numbers = #tpu.dot_dimension_numbers<[1], [0], [0], [1], [0, 0, 1, 1], [], []>} : vector<2x32xf32>, vector<32x128xf32>, vector<2x128xf32> -> vector<2x128xf32>
    %c0_3 = arith.constant 0 : index
    %c0_4 = arith.constant 0 : index
    %3 = vector.load %arg1[%c0_3, %c0_4] : memref<2x32xf32, #tpu.memory_space<vmem>>, vector<2x32xf32>
    %c0_5 = arith.constant 0 : index
    %c0_6 = arith.constant 0 : index
    %4 = vector.load %arg3[%c0_5, %c0_6] : memref<32x128xf32, #tpu.memory_space<vmem>>, vector<32x128xf32>
    %cst_7 = arith.constant dense<0.000000e+00> : vector<2x128xf32>
    %5 = tpu.matmul %3, %4, %cst_7 {dimension_numbers = #tpu.dot_dimension_numbers<[1], [0], [0], [1], [0, 0, 1, 1], [], []>} : vector<2x32xf32>, vector<32x128xf32>, vector<2x128xf32> -> vector<2x128xf32>
    %6 = arith.mulf %2, %2 : vector<2x128xf32>
    %cst_8 = arith.constant dense<0.000000e+00> : vector<2xf32>
    %7 = vector.multi_reduction <add>, %6, %cst_8 [1] : vector<2x128xf32> to vector<2xf32>
    %8 = vector.shape_cast %7 : vector<2xf32> to vector<2x1xf32>
    %9 = math.rsqrt %8 : vector<2x1xf32>
    %10 = vector.broadcast %9 : vector<2x1xf32> to vector<2x128xf32>
    %11 = arith.mulf %2, %10 : vector<2x128xf32>
    %12 = arith.mulf %5, %5 : vector<2x128xf32>
    %cst_9 = arith.constant dense<0.000000e+00> : vector<2xf32>
    %13 = vector.multi_reduction <add>, %12, %cst_9 [1] : vector<2x128xf32> to vector<2xf32>
    %14 = vector.shape_cast %13 : vector<2xf32> to vector<2x1xf32>
    %15 = math.rsqrt %14 : vector<2x1xf32>
    %16 = vector.broadcast %15 : vector<2x1xf32> to vector<2x128xf32>
    %17 = arith.mulf %5, %16 : vector<2x128xf32>
    %18 = vector.extract_strided_slice %11 {offsets = [0, 0], sizes = [1, 128], strides = [1, 1]} : vector<2x128xf32> to vector<1x128xf32>
    %19 = vector.extract_strided_slice %11 {offsets = [1, 0], sizes = [1, 128], strides = [1, 1]} : vector<2x128xf32> to vector<1x128xf32>
    %20 = vector.extract_strided_slice %17 {offsets = [0, 0], sizes = [1, 128], strides = [1, 1]} : vector<2x128xf32> to vector<1x128xf32>
    %21 = vector.extract_strided_slice %17 {offsets = [1, 0], sizes = [1, 128], strides = [1, 1]} : vector<2x128xf32> to vector<1x128xf32>
    %22 = arith.subf %19, %18 : vector<1x128xf32>
    %23 = arith.subf %21, %20 : vector<1x128xf32>
    %24 = arith.mulf %22, %23 : vector<1x128xf32>
    %25 = vector.shape_cast %24 : vector<1x128xf32> to vector<1x1x128xf32>
    %cst_10 = arith.constant dense<0.000000e+00> : vector<1xf32>
    %26 = vector.multi_reduction <add>, %25, %cst_10 [1, 2] : vector<1x1x128xf32> to vector<1xf32>
    %27 = vector.shape_cast %26 : vector<1xf32> to vector<1x1x1xf32>
    %28 = vector.extract %27[0, 0, 0] : f32 from vector<1x1x1xf32>
    %29 = arith.mulf %22, %22 : vector<1x128xf32>
    %30 = vector.shape_cast %29 : vector<1x128xf32> to vector<1x1x128xf32>
    %cst_11 = arith.constant dense<0.000000e+00> : vector<1xf32>
    %31 = vector.multi_reduction <add>, %30, %cst_11 [1, 2] : vector<1x1x128xf32> to vector<1xf32>
    %32 = vector.shape_cast %31 : vector<1xf32> to vector<1x1x1xf32>
    %33 = vector.extract %32[0, 0, 0] : f32 from vector<1x1x1xf32>
    %34 = arith.mulf %23, %23 : vector<1x128xf32>
    %35 = vector.shape_cast %34 : vector<1x128xf32> to vector<1x1x128xf32>
    %cst_12 = arith.constant dense<0.000000e+00> : vector<1xf32>
    %36 = vector.multi_reduction <add>, %35, %cst_12 [1, 2] : vector<1x1x128xf32> to vector<1xf32>
    %37 = vector.shape_cast %36 : vector<1xf32> to vector<1x1x1xf32>
    %38 = vector.extract %37[0, 0, 0] : f32 from vector<1x1x1xf32>
    %39 = arith.mulf %18, %21 : vector<1x128xf32>
    %40 = vector.shape_cast %39 : vector<1x128xf32> to vector<1x1x128xf32>
    %cst_13 = arith.constant dense<0.000000e+00> : vector<1xf32>
    %41 = vector.multi_reduction <add>, %40, %cst_13 [1, 2] : vector<1x1x128xf32> to vector<1xf32>
    %42 = vector.shape_cast %41 : vector<1xf32> to vector<1x1x1xf32>
    %43 = vector.extract %42[0, 0, 0] : f32 from vector<1x1x1xf32>
    %44 = arith.mulf %19, %21 : vector<1x128xf32>
    %45 = vector.shape_cast %44 : vector<1x128xf32> to vector<1x1x128xf32>
    %cst_14 = arith.constant dense<0.000000e+00> : vector<1xf32>
    %46 = vector.multi_reduction <add>, %45, %cst_14 [1, 2] : vector<1x1x128xf32> to vector<1xf32>
    %47 = vector.shape_cast %46 : vector<1xf32> to vector<1x1x1xf32>
    %48 = vector.extract %47[0, 0, 0] : f32 from vector<1x1x1xf32>
    %cst_15 = arith.constant 0.000000e+00 : f32
    %49 = arith.maximumf %33, %cst_15 : f32
    %50 = math.sqrt %49 : f32
    %cst_16 = arith.constant 9.99999993E-9 : f32
    %51 = arith.maximumf %50, %cst_16 : f32
    %cst_17 = arith.constant 0.000000e+00 : f32
    %52 = arith.maximumf %38, %cst_17 : f32
    %53 = math.sqrt %52 : f32
    %cst_18 = arith.constant 9.99999993E-9 : f32
    %54 = arith.maximumf %53, %cst_18 : f32
    %55 = math.absf %28 : f32
    %56 = arith.mulf %51, %54 : f32
    %57 = arith.divf %55, %56 : f32
    %c0_19 = arith.constant 0 : index
    %58 = memref.load %arg4[%c0_19] : memref<3xf32, #tpu.memory_space<smem>>
    memref.store %57, %arg4[%c0_19] : memref<3xf32, #tpu.memory_space<smem>>
    %c1 = arith.constant 1 : index
    %59 = memref.load %arg4[%c1] : memref<3xf32, #tpu.memory_space<smem>>
    memref.store %43, %arg4[%c1] : memref<3xf32, #tpu.memory_space<smem>>
    %c2 = arith.constant 2 : index
    %60 = memref.load %arg4[%c2] : memref<3xf32, #tpu.memory_space<smem>>
    memref.store %48, %arg4[%c2] : memref<3xf32, #tpu.memory_space<smem>>
    return
  }
}

</mosaic_0001>

<llo_original>
// kernel: tpu_custom_call.1
$region0: #{tpu_custom_call.1}
  #allocation0 [shape = 'u32[]', space=smem, size = 0x4, offset = 0x4, fixed_abs, tag = 'smem constant byte address 0x4 - core index']
  #allocation1 [shape = 'u32[144,128]{1,0:T(1,128)}', space=vmem, size = 0x12000, scoped, tag = 'internal scratch']
  %s0 = inlined_call_operand.hbm [shape: f32[2,32], index: 0, kind: input, shape index: {}]
  %s1 = inlined_call_operand.vmem [shape: f32[2,32], index: 1, kind: input, shape index: {}]
  %s2 = inlined_call_operand.hbm [shape: f32[32,128], index: 2, kind: input, shape index: {}]
  %s3 = inlined_call_operand.hbm [shape: f32[32,128], index: 3, kind: input, shape index: {}]
  %s4 = inlined_call_operand.hbm [shape: f32[3], index: 4, kind: output, shape index: {}]
  %s5 = sld [smem:[#allocation0]]
  $region38: #{tpu_custom_call.1} parent=0
    _
  %s7 = ssub.s32 1, %s5
  %s8 = scalar_select 0, %s7, %s5
  $region1: #{tpu_custom_call.1} parent=0
    #allocation2 [shape = 'u8[1024]{0}', space=vmem, size = 0x400, scoped, tag = 'input window, operand 0, single buffered']
    #allocation3 [shape = 's32[1]{0}', space=sflag, size = 0x4, scoped, tag = 'scoped memory for tpu_custom_call.1']
    #allocation4 [shape = 's32[1]{0}', space=sflag, size = 0x4, scoped, tag = 'scoped memory for tpu_custom_call.1']
    #allocation5 [shape = 'u8[16384]{0}', space=vmem, size = 0x4000, scoped, tag = 'input window, operand 2, single buffered']
    #allocation6 [shape = 's32[1]{0}', space=sflag, size = 0x4, scoped, tag = 'scoped memory for tpu_custom_call.1']
    #allocation7 [shape = 'u8[16384]{0}', space=vmem, size = 0x4000, scoped, tag = 'input window, operand 3, single buffered']
    #allocation8 [shape = 'u8[512]{0}', space=smem, size = 0x200, scoped, tag = 'output window, operand 0, single buffered']
    %9 = vsyncpa [#allocation3], 0
    %10 = vsyncpa [#allocation6], 0
    %11 = vsyncpa [#allocation4], 0
    // Predicated region
    $region2: #{tpu_custom_call.1} parent=1 // pred_check
      _
    $region3: #{tpu_custom_call.1} parent=1 // pred_check_branch
      %13 = sbr.rel (0) target = $region5
    $region4: #{tpu_custom_call.1} parent=1 // pred_region
      %s15 = ssub.s32 32, 32
      %16 = vsyncadd [#allocation3], %s15
      %s18 = sshll.u32 [#allocation2], 4
      %s19 = int_to_ptr.vmem [resolvable:$true] %s18
      %21 = dma.hbm_to_vmem [thread:$0]  %s0, 32, %s19, [#allocation3]
    $region5: #{tpu_custom_call.1} parent=1 // pred_fallthru
      _
    // Predicated region
    $region6: #{tpu_custom_call.1} parent=1 // pred_check
      _
    $region7: #{tpu_custom_call.1} parent=1 // pred_check_branch
      %23 = sbr.rel (0) target = $region9
    $region8: #{tpu_custom_call.1} parent=1 // pred_region
      _
    $region9: #{tpu_custom_call.1} parent=1 // pred_fallthru
      _
    // Predicated region
    $region10: #{tpu_custom_call.1} parent=1 // pred_check
      _
    $region11: #{tpu_custom_call.1} parent=1 // pred_check_branch
      %25 = sbr.rel (0) target = $region13
    $region12: #{tpu_custom_call.1} parent=1 // pred_region
      %s27 = ssub.s32 512, 512
      %28 = vsyncadd [#allocation6], %s27
      %s29 = sshll.u32 [#allocation5], 4
      %s30 = int_to_ptr.vmem [resolvable:$true] %s29
      %35 = dma.hbm_to_vmem [thread:$0]  %s2, 512, %s30, [#allocation6], 128, 128, 8
    $region13: #{tpu_custom_call.1} parent=1 // pred_fallthru
      _
    // Predicated region
    $region14: #{tpu_custom_call.1} parent=1 // pred_check
      _
    $region15: #{tpu_custom_call.1} parent=1 // pred_check_branch
      %37 = sbr.rel (0) target = $region17
    $region16: #{tpu_custom_call.1} parent=1 // pred_region
      %s39 = ssub.s32 512, 512
      %40 = vsyncadd [#allocation6], %s39
      %s41 = sshll.u32 [#allocation7], 4
      %s42 = int_to_ptr.vmem [resolvable:$true] %s41
      %47 = dma.hbm_to_vmem [thread:$0]  %s3, 512, %s42, [#allocation6], 128, 128, 8
    $region17: #{tpu_custom_call.1} parent=1 // pred_fallthru
      _
    // Predicated region
    $region18: #{tpu_custom_call.1} parent=1 // pred_check
      _
    $region19: #{tpu_custom_call.1} parent=1 // pred_check_branch
      %49 = sbr.rel (0) target = $region21
    $region20: #{tpu_custom_call.1} parent=1 // pred_region
      %50 = dma.done [#allocation3], 32
    $region21: #{tpu_custom_call.1} parent=1 // pred_fallthru
      _
    // Predicated region
    $region22: #{tpu_custom_call.1} parent=1 // pred_check
      _
    $region23: #{tpu_custom_call.1} parent=1 // pred_check_branch
      %52 = sbr.rel (0) target = $region25
    $region24: #{tpu_custom_call.1} parent=1 // pred_region
      %53 = dma.done [#allocation6], 512
    $region25: #{tpu_custom_call.1} parent=1 // pred_fallthru
      _
    // Predicated region
    $region26: #{tpu_custom_call.1} parent=1 // pred_check
      _
    $region27: #{tpu_custom_call.1} parent=1 // pred_check_branch
      %55 = sbr.rel (0) target = $region29
    $region28: #{tpu_custom_call.1} parent=1 // pred_region
      %56 = dma.done [#allocation6], 512
    $region29: #{tpu_custom_call.1} parent=1 // pred_fallthru
      _
    %v57 = vld [vmem:[#allocation2] sm:$0x3]
    %v58 = vld [vmem:[#allocation5] sm:$0xff]
    %v59 = vld [vmem:[#allocation5 + $0x8] sm:$0xff]
    %v60 = vld [vmem:[#allocation5 + $0x10] sm:$0xff]
    %v61 = vld [vmem:[#allocation5 + $0x18] sm:$0xff]
    %vm62 = vcmask 261120
    %v64 = vsel %vm62, %v57, 0
    %66 = vmatprep.subr.mxu0 0.0
    %67 = vmatpush1.msra.mxu0 %v58
    %68 = vmatprep.subr.mxu0 0.0
    %69 = vmatpush1.msra.mxu0 %v59
    %70 = vmatprep.subr.mxu0 0.0
    %71 = vmatpush1.msra.mxu0 %v60
    %72 = vmatprep.subr.mxu0 0.0
    %73 = vmatpush1.msra.mxu0 %v61
    %74 = vmatprep.subr.mxu0 0.0
    %75 = vmatpush1.msra.mxu0 0.0
    %76 = vmatprep.subr.mxu0 0.0
    %77 = vmatpush1.msra.mxu0 0.0
    %78 = vmatprep.subr.mxu0 0.0
    %79 = vmatpush1.msra.mxu0 0.0
    %80 = vmatprep.subr.mxu0 0.0
    %81 = vmatpush1.msra.mxu0 0.0
    %82 = vmatprep.subr.mxu0 0.0
    %83 = vmatpush1.msra.mxu0 0.0
    %84 = vmatprep.subr.mxu0 0.0
    %85 = vmatpush1.msra.mxu0 0.0
    %86 = vmatprep.subr.mxu0 0.0
    %87 = vmatpush1.msra.mxu0 0.0
    %88 = vmatprep.subr.mxu0 0.0
    %89 = vmatpush1.msra.mxu0 0.0
    %90 = vmatprep.subr.mxu0 0.0
    %91 = vmatpush1.msra.mxu0 0.0
    %92 = vmatprep.subr.mxu0 0.0
    %93 = vmatpush1.msra.mxu0 0.0
    %94 = vmatprep.subr.mxu0 0.0
    %95 = vmatpush1.msra.mxu0 0.0
    %96 = vmatprep.subr.mxu0 0.0
    %97 = vmatpush1.msra.mxu0 0.0
    %98 = vmatprep.subr.mxu0 0.0
    %99 = vmatpush1.msra.mxu0 0.0
    %100 = vmatprep.subr.mxu0 0.0
    %101 = vmatpush1.msra.mxu0 0.0
    %102 = vmatprep.subr.mxu0 0.0
    %103 = vmatpush1.msra.mxu0 0.0
    %104 = vmatprep.subr.mxu0 0.0
    %105 = vmatpush1.msra.mxu0 0.0
    %106 = vmatprep.subr.mxu0 0.0
    %107 = vmatpush1.msra.mxu0 0.0
    %108 = vmatprep.subr.mxu0 0.0
    %109 = vmatpush1.msra.mxu0 0.0
    %110 = vmatprep.subr.mxu0 0.0
    %111 = vmatpush1.msra.mxu0 0.0
    %112 = vmatprep.subr.mxu0 0.0
    %113 = vmatpush1.msra.mxu0 0.0
    %114 = vmatprep.subr.mxu0 0.0
    %115 = vmatpush1.msra.mxu0 0.0
    %116 = vmatprep.subr.mxu0 0.0
    %117 = vmatpush1.msra.mxu0 0.0
    %118 = vmatprep.subr.mxu0 0.0
    %119 = vmatpush1.msra.mxu0 0.0
    %120 = vmatprep.subr.mxu0 0.0
    %121 = vmatpush1.msra.mxu0 0.0
    %122 = vmatprep.subr.mxu0 0.0
    %123 = vmatpush1.msra.mxu0 0.0
    %124 = vmatprep.subr.mxu0 0.0
    %125 = vmatpush1.msra.mxu0 0.0
    %126 = vmatprep.subr.mxu0 0.0
    %127 = vmatpush1.msra.mxu0 0.0
    %128 = vmatprep.subr.mxu0 0.0
    %129 = vmatpush1.msra.mxu0 0.0
    %130 = vmatprep.mubr.f32.mxu0 0.0
    %131 = vmatmul.mubr.f32.gmra.mrb[0].mxu0 %v64
    %v132 = vpop.f32.mrb[0].mxu0
    %v133 = vadd.f32 0.0, %v132
    %v134 = vpop.f32.mrb[0].mxu0
    %135 = vdwg.mxu0
    %v136 = vld [vmem:[%s1] sm:$0x3]
    %v137 = vld [vmem:[#allocation7] sm:$0xff]
    %v138 = vld [vmem:[#allocation7 + $0x8] sm:$0xff]
    %v139 = vld [vmem:[#allocation7 + $0x10] sm:$0xff]
    %v140 = vld [vmem:[#allocation7 + $0x18] sm:$0xff]
    %v142 = vsel %vm62, %v136, 0
    %144 = vmatprep.subr.mxu0 0.0
    %145 = vmatpush1.msra.mxu0 %v137
    %146 = vmatprep.subr.mxu0 0.0
    %147 = vmatpush1.msra.mxu0 %v138
    %148 = vmatprep.subr.mxu0 0.0
    %149 = vmatpush1.msra.mxu0 %v139
    %150 = vmatprep.subr.mxu0 0.0
    %151 = vmatpush1.msra.mxu0 %v140
    %152 = vmatprep.subr.mxu0 0.0
    %153 = vmatpush1.msra.mxu0 0.0
    %154 = vmatprep.subr.mxu0 0.0
    %155 = vmatpush1.msra.mxu0 0.0
    %156 = vmatprep.subr.mxu0 0.0
    %157 = vmatpush1.msra.mxu0 0.0
    %158 = vmatprep.subr.mxu0 0.0
    %159 = vmatpush1.msra.mxu0 0.0
    %160 = vmatprep.subr.mxu0 0.0
    %161 = vmatpush1.msra.mxu0 0.0
    %162 = vmatprep.subr.mxu0 0.0
    %163 = vmatpush1.msra.mxu0 0.0
    %164 = vmatprep.subr.mxu0 0.0
    %165 = vmatpush1.msra.mxu0 0.0
    %166 = vmatprep.subr.mxu0 0.0
    %167 = vmatpush1.msra.mxu0 0.0
    %168 = vmatprep.subr.mxu0 0.0
    %169 = vmatpush1.msra.mxu0 0.0
    %170 = vmatprep.subr.mxu0 0.0
    %171 = vmatpush1.msra.mxu0 0.0
    %172 = vmatprep.subr.mxu0 0.0
    %173 = vmatpush1.msra.mxu0 0.0
    %174 = vmatprep.subr.mxu0 0.0
    %175 = vmatpush1.msra.mxu0 0.0
    %176 = vmatprep.subr.mxu0 0.0
    %177 = vmatpush1.msra.mxu0 0.0
    %178 = vmatprep.subr.mxu0 0.0
    %179 = vmatpush1.msra.mxu0 0.0
    %180 = vmatprep.subr.mxu0 0.0
    %181 = vmatpush1.msra.mxu0 0.0
    %182 = vmatprep.subr.mxu0 0.0
    %183 = vmatpush1.msra.mxu0 0.0
    %184 = vmatprep.subr.mxu0 0.0
    %185 = vmatpush1.msra.mxu0 0.0
    %186 = vmatprep.subr.mxu0 0.0
    %187 = vmatpush1.msra.mxu0 0.0
    %188 = vmatprep.subr.mxu0 0.0
    %189 = vmatpush1.msra.mxu0 0.0
    %190 = vmatprep.subr.mxu0 0.0
    %191 = vmatpush1.msra.mxu0 0.0
    %192 = vmatprep.subr.mxu0 0.0
    %193 = vmatpush1.msra.mxu0 0.0
    %194 = vmatprep.subr.mxu0 0.0
    %195 = vmatpush1.msra.mxu0 0.0
    %196 = vmatprep.subr.mxu0 0.0
    %197 = vmatpush1.msra.mxu0 0.0
    %198 = vmatprep.subr.mxu0 0.0
    %199 = vmatpush1.msra.mxu0 0.0
    %200 = vmatprep.subr.mxu0 0.0
    %201 = vmatpush1.msra.mxu0 0.0
    %202 = vmatprep.subr.mxu0 0.0
    %203 = vmatpush1.msra.mxu0 0.0
    %204 = vmatprep.subr.mxu0 0.0
    %205 = vmatpush1.msra.mxu0 0.0
    %206 = vmatprep.subr.mxu0 0.0
    %207 = vmatpush1.msra.mxu0 0.0
    %208 = vmatprep.mubr.f32.mxu0 0.0
    %209 = vmatmul.mubr.f32.gmra.mrb[0].mxu0 %v142
    %v210 = vpop.f32.mrb[0].mxu0
    %v211 = vadd.f32 0.0, %v210
    %v212 = vpop.f32.mrb[0].mxu0
    %213 = vdwg.mxu0
    %v214 = vmul.f32 %v133, %v133
    %vm215 = vcmask 1041408
    %v216 = vsel %vm215, %v214, 0.0
    %217 = vadd.xlane.f32.xlu0 %v216
    %v218 = vpop.xlane.xlu0 %217
    %v219 = vrsqrt.pop %v218
    %v220 = vmul.f32 %v133, %v219
    %v221 = vmul.f32 %v211, %v211
    %v222 = vsel %vm215, %v221, 0.0
    %223 = vadd.xlane.f32.xlu0 %v222
    %v224 = vpop.xlane.xlu0 %223
    %v225 = vrsqrt.pop %v224
    %v226 = vmul.f32 %v211, %v225
    %v228 = vrot.slane %v220, 7
    %v230 = vsub.f32 %v220, %v228
    %v232 = vrot.slane %v226, 7
    %v234 = vsub.f32 %v226, %v232
    %v235 = vmul.f32 %v230, %v234
    %v237 = vrot.slane %v235, 1
    %vm239 = vcmask 1040384
    %v240 = vsel %vm239, %v237, 0.0
    %241 = vadd.xlane.f32.xlu0 %v240
    %v242 = vpop.xlane.xlu0 %241
    %v243 = vrot.slane %v242, 4
    %v244 = vadd.f32 %v242, %v243
    %v245 = vrot.slane %v244, 2
    %v246 = vadd.f32 %v244, %v245
    %v247 = vrot.slane %v246, 1
    %v248 = vadd.f32 %v246, %v247
    %s249 = vtos %v248
    %v250 = vmul.f32 %v230, %v230
    %v252 = vrot.slane %v250, 1
    %v254 = vsel %vm239, %v252, 0.0
    %255 = vadd.xlane.f32.xlu0 %v254
    %v256 = vpop.xlane.xlu0 %255
    %v257 = vrot.slane %v256, 4
    %v258 = vadd.f32 %v256, %v257
    %v259 = vrot.slane %v258, 2
    %v260 = vadd.f32 %v258, %v259
    %v261 = vrot.slane %v260, 1
    %v262 = vadd.f32 %v260, %v261
    %s263 = vtos %v262
    %v264 = vmul.f32 %v234, %v234
    %v266 = vrot.slane %v264, 1
    %v268 = vsel %vm239, %v266, 0.0
    %269 = vadd.xlane.f32.xlu0 %v268
    %v270 = vpop.xlane.xlu0 %269
    %v271 = vrot.slane %v270, 4
    %v272 = vadd.f32 %v270, %v271
    %v273 = vrot.slane %v272, 2
    %v274 = vadd.f32 %v272, %v273
    %v275 = vrot.slane %v274, 1
    %v276 = vadd.f32 %v274, %v275
    %s277 = vtos %v276
    %v278 = vrot.slane %v226, 1
    %v280 = vmul.f32 %v220, %v278
    %v281 = vsel %vm239, %v280, 0.0
    %282 = vadd.xlane.f32.xlu0 %v281
    %v283 = vpop.xlane.xlu0 %282
    %v284 = vrot.slane %v283, 4
    %v285 = vadd.f32 %v283, %v284
    %v286 = vrot.slane %v285, 2
    %v287 = vadd.f32 %v285, %v286
    %v288 = vrot.slane %v287, 1
    %v289 = vadd.f32 %v287, %v288
    %s290 = vtos %v289
    %v291 = vmul.f32 %v220, %v226
    %v293 = vrot.slane %v291, 1
    %v295 = vsel %vm239, %v293, 0.0
    %296 = vadd.xlane.f32.xlu0 %v295
    %v297 = vpop.xlane.xlu0 %296
    %v298 = vrot.slane %v297, 4
    %v299 = vadd.f32 %v297, %v298
    %v300 = vrot.slane %v299, 2
    %v301 = vadd.f32 %v299, %v300
    %v302 = vrot.slane %v301, 1
    %v303 = vadd.f32 %v301, %v302
    %s304 = vtos %v303
    %s305 = smax.f32 %s263, 0.0
    %v306 = vstv %s305
    %v307 = vrsqrt.pop %v306
    %v308 = vmul.f32 %v306, %v307
    %vm309 = vcmp.eq.f32.partialorder %v306, inf
    %v310 = vsel %vm309, %v306, %v308
    %vm311 = vcmp.eq.f32.partialorder %v306, 0.0
    %v312 = vand.u32 %v306, 2147483648
    %v313 = vsel %vm311, %v312, %v310
    %s314 = vtos %v313
    %s315 = smax.f32 %s314, 1e-08
    %s316 = smax.f32 %s277, 0.0
    %v317 = vstv %s316
    %v318 = vrsqrt.pop %v317
    %v319 = vmul.f32 %v317, %v318
    %vm320 = vcmp.eq.f32.partialorder %v317, inf
    %v321 = vsel %vm320, %v317, %v319
    %vm322 = vcmp.eq.f32.partialorder %v317, 0.0
    %v323 = vand.u32 %v317, 2147483648
    %v324 = vsel %vm322, %v323, %v321
    %s325 = vtos %v324
    %s326 = smax.f32 %s325, 1e-08
    %s327 = sand.u32 2147483647, %s249
    %s328 = smul.f32 %s315, %s326
    %v329 = vstv %s328
    %v330 = vrcp.pop %v329
    %s331 = vtos %v330
    %s332 = smul.f32 %s327, %s331
    %s333 = scalar_lea.smem [#allocation8], 0
    %334 = sst [smem:[%s333]] %s332
    %s335 = scalar_lea.smem [#allocation8], 1
    %336 = sst [smem:[%s335]] %s290
    %s337 = scalar_lea.smem [#allocation8], 2
    %338 = sst [smem:[%s337]] %s304
    // Predicated region
    $region30: #{tpu_custom_call.1} parent=1 // pred_check
      _
    $region31: #{tpu_custom_call.1} parent=1 // pred_check_branch
      %340 = sbr.rel (0) target = $region33
    $region32: #{tpu_custom_call.1} parent=1 // pred_region
      %s342 = ssub.s32 16, 16
      %343 = vsyncadd [#allocation4], %s342
      %346 = dma.smem_to_hbm [#allocation8], 16, %s4, [#allocation4]
    $region33: #{tpu_custom_call.1} parent=1 // pred_fallthru
      _
    // Predicated region
    $region34: #{tpu_custom_call.1} parent=1 // pred_check
      _
    $region35: #{tpu_custom_call.1} parent=1 // pred_check_branch
      %348 = sbr.rel (0) target = $region37
    $region36: #{tpu_custom_call.1} parent=1 // pred_region
      %349 = dma.done [#allocation4], 16
    $region37: #{tpu_custom_call.1} parent=1 // pred_fallthru
      _
    %350 = sfence
    %351 = vsyncpa [#allocation3], 1
    %352 = vsyncpa [#allocation6], 1
    %353 = vsyncpa [#allocation4], 1

</llo_original>
